<compile_context>
chip_gen: v7x
topology: tpu7x:2x2x1
jax: 0.10.0
libtpu: 0.0.40
codegen_flags: <defaults>
</compile_context>

<pallas_src>
import functools

import jax
import jax.numpy as jnp
from jax.experimental import pallas as pl
from jax.experimental.pallas import tpu as pltpu


def _rate_encode_kernel(seed_ref, thr_ref, out_ref, *, T, N, tile_t, tile_n):
    b = pl.program_id(0)    # batch
    nb = pl.program_id(1)   # feature (lane) tile
    tb = pl.program_id(2)   # time (sublane) tile -- innermost

    # Unique counter per output element: flat index into the (B, T, N) tensor.
    # (Wraps mod 2^32 for enormous tensors, which is statistically harmless.)
    base = (b * T + tb * tile_t) * N + nb * tile_n                  # scalar i32
    row = jax.lax.broadcasted_iota(jnp.int32, (tile_t, tile_n), 0)  # time offset
    col = jax.lax.broadcasted_iota(jnp.int32, (tile_t, tile_n), 1)  # feat offset
    ctr = base + row * N + col                                      # int32

    # Stateless PRNG: murmur3 fmix32 of (counter ^ premixed seed).
    h = (ctr ^ seed_ref[0]).astype(jnp.uint32)
    h = h ^ (h >> 16)
    h = h * jnp.uint32(0x85EBCA6B)
    h = h ^ (h >> 13)
    h = h * jnp.uint32(0xC2B2AE35)
    h = h ^ (h >> 16)

    # 24-bit uniform vs precomputed integer threshold: P(spike) = thr / 2^24.
    bits24 = (h >> 8).astype(jnp.int32)          # uniform in [0, 2^24)
    out_ref[...] = (bits24 < thr_ref[...]).astype(out_ref.dtype)


def rate_encode(x, T, seed=0, out_dtype=jnp.float32, tile_t=None, tile_n=None):
    """Pallas implementation of RateEncoder.forward.

    x: (B, C, H, W) float array with values (typically) in [0, 1].
    Returns (spikes, None, None) with spikes of shape (B, T, C, H, W).
    """
    B, C, H, W = x.shape
    N = C * H * W

    # 24-bit integer thresholds, computed once (tiny vs. the (B, T, N) output).
    xc = jnp.clip(x.reshape(B, N).astype(jnp.float32), 0.0, 1.0)
    thr = jnp.round(xc * jnp.float32(1 << 24)).astype(jnp.int32)
    thr = thr.reshape(B, 1, N)   # (B, 1, N): lane-dense, sublane dim == full dim

    # Tile selection: full extent when small, otherwise (8, 128)-aligned tiles
    # sized for ~4 MiB output blocks (x2 double-buffering stays well under the
    # scoped-VMEM defaults on v5e/v6e/v7x).
    itemsize = jnp.dtype(out_dtype).itemsize
    if tile_t is None:
        tile_t = T if T <= 64 else 64                       # full T or mult. of 8
    if tile_n is None:
        want = max(128, (4 << 20) // (tile_t * itemsize))
        tile_n = N if N <= want else (want // 128) * 128    # full N or mult. of 128

    grid = (B, pl.cdiv(N, tile_n), pl.cdiv(T, tile_t))

    # Premix the seed on the host so the kernel only does a vector XOR.
    mixed = (int(seed) * 0x9E3779B9) & 0xFFFFFFFF
    if mixed >= (1 << 31):
        mixed -= 1 << 32
    seed_arr = jnp.array([mixed], dtype=jnp.int32)

    kernel = functools.partial(_rate_encode_kernel, T=T, N=N,
                               tile_t=tile_t, tile_n=tile_n)

    spikes_flat = pl.pallas_call(
        kernel,
        out_shape=jax.ShapeDtypeStruct((B, T, N), out_dtype),
        grid_spec=pltpu.PrefetchScalarGridSpec(
            num_scalar_prefetch=1,
            grid=grid,
            # Thresholds depend only on (b, n-block): with the time axis
            # innermost they stay VMEM-resident across all time steps.
            in_specs=[pl.BlockSpec((None, 1, tile_n),
                                   lambda b, nb, tb, seed: (b, 0, nb))],
            # Final (B, T, N) layout written directly; no wrapper transpose.
            out_specs=pl.BlockSpec((None, tile_t, tile_n),
                                   lambda b, nb, tb, seed: (b, tb, nb)),
        ),
        compiler_params=pltpu.CompilerParams(
            dimension_semantics=("parallel", "parallel", "arbitrary"),
            vmem_limit_bytes=32 << 20),
    )(seed_arr, thr)

    spikes = spikes_flat.reshape(B, T, C, H, W)
    return (spikes, None, None)


if __name__ == "__main__":
    # Small, deterministic example consistent with the module's forward:
    # image-like input (B, C, H, W), values in [0, 1], T time steps.
    B, C, H, W = 2, 4, 16, 16
    T = 8

    key = jax.random.PRNGKey(0)
    x = jax.random.uniform(key, (B, C, H, W), dtype=jnp.float32)

    spikes, a, b = rate_encode(x, T, seed=0)
    spikes = jax.block_until_ready(spikes)

    # Sanity checks: shape, dtype, binary values, mean spike rate tracks input.
    assert spikes.shape == (B, T, C, H, W)
    assert spikes.dtype == jnp.float32
    assert a is None and b is None
    vals = jnp.unique(spikes)
    assert bool(jnp.all((vals == 0.0) | (vals == 1.0)))
    mean_rate = float(jnp.mean(spikes))
    mean_x = float(jnp.mean(x))
    assert abs(mean_rate - mean_x) < 0.05, (mean_rate, mean_x)

    print("KERNEL_OK")
</pallas_src>

<mosaic_0001>
module attributes {stable_mosaic.version = 11 : i64} {
  func.func @_rate_encode_kernel(%arg0: i32, %arg1: i32, %arg2: i32, %arg3: memref<1xi32, #tpu.memory_space<smem>>, %arg4: memref<1x1x1024xi32, #tpu.memory_space<vmem>>, %arg5: memref<1x8x1024xf32, #tpu.memory_space<vmem>>) attributes {dimension_semantics = [#tpu.dimension_semantics<parallel>, #tpu.dimension_semantics<parallel>, #tpu.dimension_semantics<arbitrary>], iteration_bounds = array<i64: 2, 1, 1>, scalar_prefetch = 1 : i64, scratch_operands = 0 : i64, tpu.core_type = #tpu.core_type<tc>, window_params = [{transform_indices = @transform_0, window_bounds = array<i64: 1, 1, 1024>}, {transform_indices = @transform_1, window_bounds = array<i64: 1, 8, 1024>}]} {
    %c8_i32 = arith.constant 8 : i32
    %0 = arith.muli %arg0, %c8_i32 : i32
    %c8_i32_0 = arith.constant 8 : i32
    %1 = arith.muli %arg2, %c8_i32_0 : i32
    %2 = arith.addi %0, %1 : i32
    %c1024_i32 = arith.constant 1024 : i32
    %3 = arith.muli %2, %c1024_i32 : i32
    %c1024_i32_1 = arith.constant 1024 : i32
    %4 = arith.muli %arg1, %c1024_i32_1 : i32
    %5 = arith.addi %3, %4 : i32
    %6 = tpu.iota {dimensions = array<i32: 0>} : vector<8x1024xi32>
    %7 = tpu.iota {dimensions = array<i32: 1>} : vector<8x1024xi32>
    %c1024_i32_2 = arith.constant 1024 : i32
    %8 = vector.broadcast %c1024_i32_2 : i32 to vector<8x1024xi32>
    %9 = arith.muli %6, %8 : vector<8x1024xi32>
    %10 = vector.broadcast %5 : i32 to vector<8x1024xi32>
    %11 = arith.addi %10, %9 : vector<8x1024xi32>
    %12 = arith.addi %11, %7 : vector<8x1024xi32>
    %c0 = arith.constant 0 : index
    %13 = memref.load %arg3[%c0] : memref<1xi32, #tpu.memory_space<smem>>
    %14 = vector.broadcast %13 : i32 to vector<8x1024xi32>
    %15 = arith.xori %12, %14 : vector<8x1024xi32>
    %c16_i32 = arith.constant 16 : i32
    %16 = vector.broadcast %c16_i32 : i32 to vector<8x1024xi32>
    %17 = arith.shrui %15, %16 : vector<8x1024xi32>
    %18 = arith.xori %15, %17 : vector<8x1024xi32>
    %c-2048144789_i32 = arith.constant -2048144789 : i32
    %19 = vector.broadcast %c-2048144789_i32 : i32 to vector<8x1024xi32>
    %20 = arith.muli %18, %19 : vector<8x1024xi32>
    %c13_i32 = arith.constant 13 : i32
    %21 = vector.broadcast %c13_i32 : i32 to vector<8x1024xi32>
    %22 = arith.shrui %20, %21 : vector<8x1024xi32>
    %23 = arith.xori %20, %22 : vector<8x1024xi32>
    %c-1028477387_i32 = arith.constant -1028477387 : i32
    %24 = vector.broadcast %c-1028477387_i32 : i32 to vector<8x1024xi32>
    %25 = arith.muli %23, %24 : vector<8x1024xi32>
    %c16_i32_3 = arith.constant 16 : i32
    %26 = vector.broadcast %c16_i32_3 : i32 to vector<8x1024xi32>
    %27 = arith.shrui %25, %26 : vector<8x1024xi32>
    %28 = arith.xori %25, %27 : vector<8x1024xi32>
    %c8_i32_4 = arith.constant 8 : i32
    %29 = vector.broadcast %c8_i32_4 : i32 to vector<8x1024xi32>
    %30 = arith.shrui %28, %29 : vector<8x1024xi32>
    %c0_5 = arith.constant 0 : index
    %c0_6 = arith.constant 0 : index
    %c0_7 = arith.constant 0 : index
    %31 = vector.load %arg4[%c0_5, %c0_6, %c0_7] : memref<1x1x1024xi32, #tpu.memory_space<vmem>>, vector<1x1x1024xi32>
    %32 = vector.shape_cast %31 : vector<1x1x1024xi32> to vector<1x1024xi32>
    %33 = vector.broadcast %32 : vector<1x1024xi32> to vector<8x1024xi32>
    %34 = arith.cmpi slt, %30, %33 : vector<8x1024xi32>
    %35 = arith.extui %34 : vector<8x1024xi1> to vector<8x1024xi32>
    %36 = arith.sitofp %35 : vector<8x1024xi32> to vector<8x1024xf32>
    %c0_8 = arith.constant 0 : index
    %c0_9 = arith.constant 0 : index
    %c0_10 = arith.constant 0 : index
    %37 = vector.load %arg5[%c0_8, %c0_9, %c0_10] : memref<1x8x1024xf32, #tpu.memory_space<vmem>>, vector<1x8x1024xf32>
    %38 = vector.shape_cast %37 : vector<1x8x1024xf32> to vector<8x1024xf32>
    %39 = vector.shape_cast %36 : vector<8x1024xf32> to vector<1x8x1024xf32>
    tpu.vector_store %arg5[%c0_8, %c0_9, %c0_10], %39 {strides = array<i32>} : memref<1x8x1024xf32, #tpu.memory_space<vmem>>, vector<1x8x1024xf32>,
    return
  }
  func.func @transform_0(%arg0: i32, %arg1: i32, %arg2: i32, %arg3: memref<1xi32, #tpu.memory_space<smem>>) -> (i32, i32, i32) {
    %c0_i32 = arith.constant 0 : i32
    %c0_i32_0 = arith.constant 0 : i32
    return %arg0, %c0_i32, %arg1 : i32, i32, i32
  }
  func.func @transform_1(%arg0: i32, %arg1: i32, %arg2: i32, %arg3: memref<1xi32, #tpu.memory_space<smem>>) -> (i32, i32, i32) {
    %c0_i32 = arith.constant 0 : i32
    return %arg0, %arg2, %arg1 : i32, i32, i32
  }
}

</mosaic_0001>

<llo_original>
// kernel: tpu_custom_call.1
$region0: #{tpu_custom_call.1}
  #allocation0 [shape = 'u32[]', space=smem, size = 0x4, offset = 0x4, fixed_abs, tag = 'smem constant byte address 0x4 - core index']
  #allocation1 [shape = 'u32[144,128]{1,0:T(1,128)}', space=vmem, size = 0x12000, scoped, tag = 'internal scratch']
  #allocation2 [shape = 's32[1]{0}', space=sflag, size = 0x4, scoped, tag = 'scoped memory for tpu_custom_call.1']
  #allocation3 [shape = 's32[1]{0:T(128)S(6)}', space=smem, size = 0x200, scoped, tag = 'prefetched SMEM operand 0']
  %s0 = inlined_call_operand.<no memory space> [shape: s32[1], index: 0, kind: input, shape index: {}]
  %s1 = inlined_call_operand.hbm [shape: s32[2,1,1024], index: 1, kind: input, shape index: {}]
  %s2 = inlined_call_operand.hbm [shape: f32[2,8,1024], index: 2, kind: output, shape index: {}]
  %s3 = sld [smem:[#allocation0]]
  $region41: #{tpu_custom_call.1} parent=0
    _
  %s5 = ssub.s32 1, %s3
  %s6 = scalar_select 0, %s5, %s3
  %7 = sst [smem:[#allocation3]] %s0
  $region1: #{tpu_custom_call.1} parent=0
    #allocation4 [shape = 'u8[8192]{0}', space=vmem, size = 0x2000, scoped, tag = 'input window, operand 1']
    #allocation5 [shape = 's32[2]{0}', space=sflag, size = 0x8, scoped, tag = 'scoped memory for tpu_custom_call.1']
    #allocation6 [shape = 's32[2]{0}', space=sflag, size = 0x8, scoped, tag = 'scoped memory for tpu_custom_call.1']
    #allocation7 [shape = 'u8[65536]{0}', space=vmem, size = 0x10000, scoped, tag = 'output window, operand 0']
    %8 = vsyncpa [#allocation5], 0
    %s9 = scalar_lea.sflag [#allocation5], 1
    %10 = vsyncpa %s9, 0
    %11 = vsyncpa [#allocation6], 0
    %s12 = scalar_lea.sflag [#allocation6], 1
    %13 = vsyncpa %s12, 0
    loop: start=0, step=1, limit=4
    $region2: #{tpu_custom_call.1} parent=1 // loop_pre_header
      _
    $region3: #{tpu_custom_call.1} parent=1 // loop_header
      %s15 = sphi 0, %s19
      %p16 = scmp.ge.s32.totalorder %s15, 4
      %s22 = sphi 0, %s41
      %s23 = sphi 0, %s37
      %s24 = sphi 0, %s33
      %s25 = sphi 0, %s22
      %s26 = sphi 0, %s23
      %s27 = sphi 0, %s24
      %s28 = sphi 0, %s25
      %s29 = sphi 0, %s26
      %s30 = sphi 0, %s27
      %s46 = sphi 0, %s48
      %s49 = sphi 0, %s46
      %s50 = sphi 0, %s49
      %s66 = sphi 0, %s50
      %s76 = sphi 0, %s78
      %s79 = sphi 0, %s76
      %s80 = sphi 0, %s79
      %s96 = sphi 0, %s80
    $region4: #{tpu_custom_call.1} parent=1 // loop_header_branch
      %18 = sbr.rel (%p16) target = $region8
    $region5: #{tpu_custom_call.1} parent=1 // loop_body
      %s20 = ssub.s32 %s15, 1
      %s21 = ssub.s32 %s15, 2
      %s31 = sadd.s32 1, %s24
      %p32 = scmp.ge.s32.totalorder %s31, 1
      %s33 = scalar_select %p32, 0, %s31
      %s34 = sadd.s32 1, %s23
      %s35 = scalar_select %p32, %s34, %s23
      %p36 = scmp.ge.s32.totalorder %s35, 1
      %s37 = scalar_select %p36, 0, %s35
      %s38 = sadd.s32 1, %s22
      %s39 = scalar_select %p36, %s38, %s22
      %p40 = scmp.ge.s32.totalorder %s39, 2
      %s41 = scalar_select %p40, 0, %s39
      %s42 = ssub.s32 %s22, %s41
      %s43 = ssub.s32 %s23, %s37
      %s44 = sor.u32 %s42, %s43
      %p45 = scmp.eq.s32.totalorder %s44, 0
      %s47 = sadd.s32 %s46, 1
      %s48 = scalar_select %p45, %s46, %s47
      %p51 = pneg %p45
      %p52 = scmp.eq.s32.totalorder %s15, 1
      %p53 = por %p51, %p52
      %p54 = scmp.ne.s32.totalorder %s46, %s49
      %p55 = scmp.eq.s32.totalorder %s15, 0
      %p56 = por %p54, %p55
      %p57 = scmp.ne.s32.totalorder %s46, %s49
      %p58 = scmp.eq.s32.totalorder %s20, 1
      %p59 = por %p57, %p58
      %p60 = scmp.ne.s32.totalorder %s49, %s50
      %p61 = scmp.eq.s32.totalorder %s20, 0
      %p62 = por %p60, %p61
      %p63 = scmp.ne.s32.totalorder %s49, %s50
      %p64 = scmp.eq.s32.totalorder %s21, 1
      %p65 = por %p63, %p64
      %p67 = scmp.ne.s32.totalorder %s50, %s66
      %p68 = scmp.eq.s32.totalorder %s21, 0
      %p69 = por %p67, %p68
      %s70 = ssub.s32 %s22, %s41
      %s71 = ssub.s32 %s24, %s33
      %s72 = sor.u32 %s70, %s71
      %s73 = ssub.s32 %s23, %s37
      %s74 = sor.u32 %s72, %s73
      %p75 = scmp.eq.s32.totalorder %s74, 0
      %s77 = sadd.s32 %s76, 1
      %s78 = scalar_select %p75, %s76, %s77
      %p81 = pneg %p75
      %p82 = scmp.eq.s32.totalorder %s15, 1
      %p83 = por %p81, %p82
      %p84 = scmp.ne.s32.totalorder %s76, %s79
      %p85 = scmp.eq.s32.totalorder %s15, 0
      %p86 = por %p84, %p85
      %p87 = scmp.ne.s32.totalorder %s76, %s79
      %p88 = scmp.eq.s32.totalorder %s20, 1
      %p89 = por %p87, %p88
      %p90 = scmp.ne.s32.totalorder %s79, %s80
      %p91 = scmp.eq.s32.totalorder %s20, 0
      %p92 = por %p90, %p91
      %p93 = scmp.ne.s32.totalorder %s79, %s80
      %p94 = scmp.eq.s32.totalorder %s21, 1
      %p95 = por %p93, %p94
      %p97 = scmp.ne.s32.totalorder %s80, %s96
      %p98 = scmp.eq.s32.totalorder %s21, 0
      %p99 = por %p97, %p98
      %p100 = scmp.le.s32.totalorder 1, %s15
      %p101 = scmp.lt.s32.totalorder %s15, 3
      %p102 = pnand %p100, %p101
      %p103 = pneg %p102
      // Predicated region
      $region9: #{tpu_custom_call.1} parent=5 // pred_check
        _
      $region10: #{tpu_custom_call.1} parent=5 // pred_check_branch
        %105 = sbr.rel (%p102) target = $region12
      $region11: #{tpu_custom_call.1} parent=5 // pred_region
        %s106 = ssub.s32 %s15, 1
      $region12: #{tpu_custom_call.1} parent=5 // pred_fallthru
        _
      %p107 = scmp.lt.s32.totalorder %s15, 2
      // Predicated region
      $region13: #{tpu_custom_call.1} parent=5 // pred_check
        %p108 = pneg %p107
      $region14: #{tpu_custom_call.1} parent=5 // pred_check_branch
        %110 = sbr.rel (%p108) target = $region16
      $region15: #{tpu_custom_call.1} parent=5 // pred_region
        // Predicated region
        $region17: #{tpu_custom_call.1} parent=15 // pred_check
          %p111 = pneg %p56
        $region18: #{tpu_custom_call.1} parent=15 // pred_check_branch
          %113 = sbr.rel (%p111) target = $region20
        $region19: #{tpu_custom_call.1} parent=15 // pred_region
          %s114 = sand.u32 %s46, 1
          %s115 = scalar_lea.sflag [#allocation5], %s114
          %s116 = sand.u32 %s46, 1
          %s117 = smul.addr %s116, 8
          %s118 = scalar_lea.vmem [#allocation4], %s117
          %s119 = smul.u32 8, %s23
          %s121 = ssub.s32 128, 128
          %122 = vsyncadd %s115, %s121
          %s123 = smul.addr %s22, 8
          %s124 = sadd.s32 %s119, %s123
          %s125 = smul.addr %s124, 16
          %s126 = scalar_lea.hbm %s1, %s125
          %s128 = sshll.u32 %s118, 4
          %s129 = int_to_ptr.vmem [resolvable:$true] %s128
          %131 = dma.hbm_to_vmem [thread:$0]  %s126, 128, %s129, %s115
        $region20: #{tpu_custom_call.1} parent=15 // pred_fallthru
          _
      $region16: #{tpu_custom_call.1} parent=5 // pred_fallthru
        _
      %p132 = scmp.le.s32.totalorder 1, %s15
      %p133 = scmp.lt.s32.totalorder %s15, 3
      %p134 = pnand %p132, %p133
      %p135 = pneg %p134
      // Predicated region
      $region21: #{tpu_custom_call.1} parent=5 // pred_check
        _
      $region22: #{tpu_custom_call.1} parent=5 // pred_check_branch
        %137 = sbr.rel (%p134) target = $region24
      $region23: #{tpu_custom_call.1} parent=5 // pred_region
        %s138 = ssub.s32 %s15, 1
        %s139 = sand.u32 %s49, 1
        %s140 = scalar_lea.sflag [#allocation5], %s139
        %s141 = sand.u32 %s49, 1
        %s142 = smul.addr %s141, 8
        %s143 = scalar_lea.vmem [#allocation4], %s142
        // Predicated region
        $region25: #{tpu_custom_call.1} parent=23 // pred_check
          %p144 = pneg %p62
        $region26: #{tpu_custom_call.1} parent=23 // pred_check_branch
          %146 = sbr.rel (%p144) target = $region28
        $region27: #{tpu_custom_call.1} parent=23 // pred_region
          %147 = dma.done %s140, 128
        $region28: #{tpu_custom_call.1} parent=23 // pred_fallthru
          _
        %s148 = sand.u32 %s49, 1
        %s149 = scalar_lea.sflag [#allocation5], %s148
        %s150 = sand.u32 %s49, 1
        %s151 = smul.addr %s150, 8
        %s152 = scalar_lea.vmem [#allocation4], %s151
        %p153 = pneg %p62
        %p154 = pneg %p59
        %p155 = pneg %p92
        %p156 = pneg %p89
        %s157 = sand.u32 %s79, 1
        %s158 = scalar_lea.sflag [#allocation6], %s157
        %s159 = sand.u32 %s79, 1
        %s160 = smul.addr %s159, 64
        %s161 = scalar_lea.vmem [#allocation7], %s160
        %s162 = smul.u32 8, %s26
        %s163 = smul.u32 8, %s26
        %s164 = smul.u32 %s25, 8
        %s165 = smul.u32 %s27, 8
        %s166 = sadd.s32 %s164, %s165
        %s167 = smul.u32 %s166, 1024
        %s168 = smul.u32 %s26, 1024
        %s169 = sadd.s32 %s167, %s168
        %v170 = vlaneseq
        %v171 = vshrl.u32 %v170, 7
        %v172 = vlaneseq
        %v173 = vand.u32 %v172, 127
        %v174 = vadd.s32 %v173, 128
        %v175 = vadd.s32 %v173, 256
        %v176 = vadd.s32 %v173, 384
        %v177 = vadd.s32 %v173, 512
        %v178 = vadd.s32 %v173, 640
        %v179 = vadd.s32 %v173, 768
        %v180 = vadd.s32 %v173, 896
        %v181 = vmul.u32 %v171, 1024
        %v182 = vstv %s169
        %v183 = vadd.s32 %v182, %v181
        %v184 = vadd.s32 %v183, %v173
        %v185 = vadd.s32 %v183, %v174
        %v186 = vadd.s32 %v183, %v175
        %v187 = vadd.s32 %v183, %v176
        %v188 = vadd.s32 %v183, %v177
        %v189 = vadd.s32 %v183, %v178
        %v190 = vadd.s32 %v183, %v179
        %v191 = vadd.s32 %v183, %v180
        %s192 = sld [smem:[#allocation3]]
        %v193 = vstv %s192
        %v194 = vxor.u32 %v184, %v193
        %v195 = vxor.u32 %v185, %v193
        %v196 = vxor.u32 %v186, %v193
        %v197 = vxor.u32 %v187, %v193
        %v198 = vxor.u32 %v188, %v193
        %v199 = vxor.u32 %v189, %v193
        %v200 = vxor.u32 %v190, %v193
        %v201 = vxor.u32 %v191, %v193
        %v202 = vshrl.u32 %v194, 16
        %v203 = vshrl.u32 %v195, 16
        %v204 = vshrl.u32 %v196, 16
        %v205 = vshrl.u32 %v197, 16
        %v206 = vshrl.u32 %v198, 16
        %v207 = vshrl.u32 %v199, 16
        %v208 = vshrl.u32 %v200, 16
        %v209 = vshrl.u32 %v201, 16
        %v210 = vxor.u32 %v194, %v202
        %v211 = vxor.u32 %v195, %v203
        %v212 = vxor.u32 %v196, %v204
        %v213 = vxor.u32 %v197, %v205
        %v214 = vxor.u32 %v198, %v206
        %v215 = vxor.u32 %v199, %v207
        %v216 = vxor.u32 %v200, %v208
        %v217 = vxor.u32 %v201, %v209
        %v218 = vmul.u32 %v210, 2246822507
        %v219 = vmul.u32 %v211, 2246822507
        %v220 = vmul.u32 %v212, 2246822507
        %v221 = vmul.u32 %v213, 2246822507
        %v222 = vmul.u32 %v214, 2246822507
        %v223 = vmul.u32 %v215, 2246822507
        %v224 = vmul.u32 %v216, 2246822507
        %v225 = vmul.u32 %v217, 2246822507
        %v226 = vshrl.u32 %v218, 13
        %v227 = vshrl.u32 %v219, 13
        %v228 = vshrl.u32 %v220, 13
        %v229 = vshrl.u32 %v221, 13
        %v230 = vshrl.u32 %v222, 13
        %v231 = vshrl.u32 %v223, 13
        %v232 = vshrl.u32 %v224, 13
        %v233 = vshrl.u32 %v225, 13
        %v234 = vxor.u32 %v218, %v226
        %v235 = vxor.u32 %v219, %v227
        %v236 = vxor.u32 %v220, %v228
        %v237 = vxor.u32 %v221, %v229
        %v238 = vxor.u32 %v222, %v230
        %v239 = vxor.u32 %v223, %v231
        %v240 = vxor.u32 %v224, %v232
        %v241 = vxor.u32 %v225, %v233
        %v242 = vmul.u32 %v234, 3266489909
        %v243 = vmul.u32 %v235, 3266489909
        %v244 = vmul.u32 %v236, 3266489909
        %v245 = vmul.u32 %v237, 3266489909
        %v246 = vmul.u32 %v238, 3266489909
        %v247 = vmul.u32 %v239, 3266489909
        %v248 = vmul.u32 %v240, 3266489909
        %v249 = vmul.u32 %v241, 3266489909
        %v250 = vshrl.u32 %v242, 16
        %v251 = vshrl.u32 %v243, 16
        %v252 = vshrl.u32 %v244, 16
        %v253 = vshrl.u32 %v245, 16
        %v254 = vshrl.u32 %v246, 16
        %v255 = vshrl.u32 %v247, 16
        %v256 = vshrl.u32 %v248, 16
        %v257 = vshrl.u32 %v249, 16
        %v258 = vxor.u32 %v242, %v250
        %v259 = vxor.u32 %v243, %v251
        %v260 = vxor.u32 %v244, %v252
        %v261 = vxor.u32 %v245, %v253
        %v262 = vxor.u32 %v246, %v254
        %v263 = vxor.u32 %v247, %v255
        %v264 = vxor.u32 %v248, %v256
        %v265 = vxor.u32 %v249, %v257
        %v266 = vshrl.u32 %v258, 8
        %v267 = vshrl.u32 %v259, 8
        %v268 = vshrl.u32 %v260, 8
        %v269 = vshrl.u32 %v261, 8
        %v270 = vshrl.u32 %v262, 8
        %v271 = vshrl.u32 %v263, 8
        %v272 = vshrl.u32 %v264, 8
        %v273 = vshrl.u32 %v265, 8
        %v274 = vld [vmem:[%s143] sm:$0xff]
        %v275 = vlaneseq
        %v276 = vshrl.u32 %v275, 7
        %v277 = vsub.s32 0, %v276
        %v278 = vrot.slane %v274, %v277
        %v279 = vlaneseq
        %v280 = vshrl.u32 %v279, 7
        %v281 = vsub.s32 1, %v280
        %v282 = vrot.slane %v274, %v281
        %v283 = vlaneseq
        %v284 = vshrl.u32 %v283, 7
        %v285 = vsub.s32 2, %v284
        %v286 = vrot.slane %v274, %v285
        %v287 = vlaneseq
        %v288 = vshrl.u32 %v287, 7
        %v289 = vsub.s32 3, %v288
        %v290 = vrot.slane %v274, %v289
        %v291 = vlaneseq
        %v292 = vshrl.u32 %v291, 7
        %v293 = vsub.s32 4, %v292
        %v294 = vrot.slane %v274, %v293
        %v295 = vlaneseq
        %v296 = vshrl.u32 %v295, 7
        %v297 = vsub.s32 5, %v296
        %v298 = vrot.slane %v274, %v297
        %v299 = vlaneseq
        %v300 = vshrl.u32 %v299, 7
        %v301 = vsub.s32 6, %v300
        %v302 = vrot.slane %v274, %v301
        %v303 = vlaneseq
        %v304 = vshrl.u32 %v303, 7
        %v305 = vsub.s32 7, %v304
        %v306 = vrot.slane %v274, %v305
        %vm307 = vcmp.lt.s32.totalorder %v266, %v278
        %vm308 = vcmp.lt.s32.totalorder %v267, %v282
        %vm309 = vcmp.lt.s32.totalorder %v268, %v286
        %vm310 = vcmp.lt.s32.totalorder %v269, %v290
        %vm311 = vcmp.lt.s32.totalorder %v270, %v294
        %vm312 = vcmp.lt.s32.totalorder %v271, %v298
        %vm313 = vcmp.lt.s32.totalorder %v272, %v302
        %vm314 = vcmp.lt.s32.totalorder %v273, %v306
        %v315 = vsel %vm307, 1, 0
        %v316 = vsel %vm308, 1, 0
        %v317 = vsel %vm309, 1, 0
        %v318 = vsel %vm310, 1, 0
        %v319 = vsel %vm311, 1, 0
        %v320 = vsel %vm312, 1, 0
        %v321 = vsel %vm313, 1, 0
        %v322 = vsel %vm314, 1, 0
        %v323 = vcvt.s32.f32 %v315
        %v324 = vcvt.s32.f32 %v316
        %v325 = vcvt.s32.f32 %v317
        %v326 = vcvt.s32.f32 %v318
        %v327 = vcvt.s32.f32 %v319
        %v328 = vcvt.s32.f32 %v320
        %v329 = vcvt.s32.f32 %v321
        %v330 = vcvt.s32.f32 %v322
        %331 = vst [vmem:[%s161] sm:$0xff] %v323
        %332 = vst [vmem:[%s161 + $0x8] sm:$0xff] %v324
        %333 = vst [vmem:[%s161 + $0x10] sm:$0xff] %v325
        %334 = vst [vmem:[%s161 + $0x18] sm:$0xff] %v326
        %335 = vst [vmem:[%s161 + $0x20] sm:$0xff] %v327
        %336 = vst [vmem:[%s161 + $0x28] sm:$0xff] %v328
        %337 = vst [vmem:[%s161 + $0x30] sm:$0xff] %v329
        %338 = vst [vmem:[%s161 + $0x38] sm:$0xff] %v330
        %s339 = sand.u32 %s79, 1
        %s340 = scalar_lea.sflag [#allocation6], %s339
        %s341 = sand.u32 %s79, 1
        %s342 = smul.addr %s341, 64
        %s343 = scalar_lea.vmem [#allocation7], %s342
        // Predicated region
        $region29: #{tpu_custom_call.1} parent=23 // pred_check
          %p344 = pneg %p89
        $region30: #{tpu_custom_call.1} parent=23 // pred_check_branch
          %346 = sbr.rel (%p344) target = $region32
        $region31: #{tpu_custom_call.1} parent=23 // pred_region
          %s347 = smul.u32 8, %s26
          %s349 = ssub.s32 1024, 1024
          %350 = vsyncadd %s340, %s349
          %s351 = smul.addr %s27, 8
          %s352 = sadd.s32 %s347, %s351
          %s353 = smul.addr %s25, 8
          %s354 = sadd.s32 %s352, %s353
          %s355 = smul.addr %s354, 128
          %s356 = scalar_lea.hbm %s2, %s355
          %s358 = sshll.u32 %s343, 4
          %s359 = int_to_ptr.vmem [resolvable:$true] %s358
          %361 = dma.vmem_to_hbm [thread:$0]  %s359, 1024, %s356, %s340
        $region32: #{tpu_custom_call.1} parent=23 // pred_fallthru
          _
      $region24: #{tpu_custom_call.1} parent=5 // pred_fallthru
        _
      %p362 = scmp.le.s32.totalorder 2, %s15
      // Predicated region
      $region33: #{tpu_custom_call.1} parent=5 // pred_check
        %p363 = pneg %p362
      $region34: #{tpu_custom_call.1} parent=5 // pred_check_branch
        %365 = sbr.rel (%p363) target = $region36
      $region35: #{tpu_custom_call.1} parent=5 // pred_region
        %s366 = ssub.s32 %s15, 2
        // Predicated region
        $region37: #{tpu_custom_call.1} parent=35 // pred_check
          %p367 = pneg %p95
        $region38: #{tpu_custom_call.1} parent=35 // pred_check_branch
          %369 = sbr.rel (%p367) target = $region40
        $region39: #{tpu_custom_call.1} parent=35 // pred_region
          %s370 = sand.u32 %s80, 1
          %s371 = scalar_lea.sflag [#allocation6], %s370
          %s372 = sand.u32 %s80, 1
          %s373 = smul.addr %s372, 64
          %s374 = scalar_lea.vmem [#allocation7], %s373
          %375 = dma.done %s371, 1024
        $region40: #{tpu_custom_call.1} parent=35 // pred_fallthru
          _
      $region36: #{tpu_custom_call.1} parent=5 // pred_fallthru
        _
    $region6: #{tpu_custom_call.1} parent=1 // loop_footer
      %s19 = sadd.s32 1, %s15
    $region7: #{tpu_custom_call.1} parent=1 // loop_footer_branch
      %14 = sbr.rel target = $region3
    $region8: #{tpu_custom_call.1} parent=1 // loop_exit
      _
    %376 = vsyncpa [#allocation5], 1
    %s377 = scalar_lea.sflag [#allocation5], 1
    %378 = vsyncpa %s377, 1
    %379 = vsyncpa [#allocation6], 1
    %s380 = scalar_lea.sflag [#allocation6], 1
    %381 = vsyncpa %s380, 1

</llo_original>
